<compile_context>
chip_gen: v6e
topology: v6e:2x2x1
jax: 0.10.0
libtpu: 0.0.40
codegen_flags: <defaults>
</compile_context>

<pallas_src>
import jax
import jax.numpy as jnp
from jax import lax
from jax.experimental import pallas as pl
from jax.experimental.pallas import tpu as pltpu


def _round_up(x: int, m: int) -> int:
    return ((x + m - 1) // m) * m


# -----------------------------------------------------------------------------
# Kernels
# -----------------------------------------------------------------------------
def _dot_nt(x, w):
    # x: (tm, tk), w: (tn, tk) -> (tm, tn) f32, contracting over the shared K
    # (dim 1 of both operands) without materializing a transposed weight copy.
    return lax.dot_general(
        x, w,
        dimension_numbers=(((1,), (1,)), ((), ())),
        preferred_element_type=jnp.float32,
    )


# --- K untiled (single reduction step): 2-D grid, both axes parallel ---------
def _linear_k1_bias_kernel(x_ref, w_ref, b_ref, o_ref):
    acc = _dot_nt(x_ref[...], w_ref[...])
    acc = acc + b_ref[...].astype(jnp.float32)       # (1, tn) broadcasts
    o_ref[...] = acc.astype(o_ref.dtype)


def _linear_k1_nobias_kernel(x_ref, w_ref, o_ref):
    o_ref[...] = _dot_nt(x_ref[...], w_ref[...]).astype(o_ref.dtype)


# --- K tiled: 3-D grid, f32 accumulator, K innermost ("arbitrary") -----------
def _linear_ktiled_bias_kernel(x_ref, w_ref, b_ref, o_ref, acc_ref):
    k = pl.program_id(2)

    @pl.when(k == 0)
    def _():
        # Fold the bias into the accumulator init (once per (n, m) tile).
        acc_ref[...] = jnp.broadcast_to(
            b_ref[...].astype(jnp.float32), acc_ref.shape
        )

    acc_ref[...] += _dot_nt(x_ref[...], w_ref[...])

    @pl.when(k == pl.num_programs(2) - 1)
    def _():
        o_ref[...] = acc_ref[...].astype(o_ref.dtype)


def _linear_ktiled_nobias_kernel(x_ref, w_ref, o_ref, acc_ref):
    k = pl.program_id(2)

    @pl.when(k == 0)
    def _():
        acc_ref[...] = jnp.zeros_like(acc_ref)

    acc_ref[...] += _dot_nt(x_ref[...], w_ref[...])

    @pl.when(k == pl.num_programs(2) - 1)
    def _():
        o_ref[...] = acc_ref[...].astype(o_ref.dtype)


# -----------------------------------------------------------------------------
# Tile selection / VMEM budgeting
# -----------------------------------------------------------------------------
def _vmem_budget_bytes():
    """Returns (working-set budget for tile sizing, vmem_limit_bytes request)."""
    phys = 64 << 20
    try:
        phys = int(getattr(pltpu.get_tpu_info(), "vmem_capacity_bytes", phys))
    except Exception:
        pass
    if phys >= (128 << 20):          # v4 / v5e / v6e: 128 MiB physical VMEM
        return 88 << 20, 100 << 20
    # v7x (64 MiB physical) or unknown generation: leave headroom for Mosaic.
    return 40 << 20, 48 << 20


def _choose_tiles(N, K, x_itemsize, w_itemsize, work_budget):
    """Pick (tm_cap, tn, tk).  Prefer untiled K (weight panel resident across
    the M loop); shrink tm before tiling K; only tile K as a last resort."""
    tn = min(512, _round_up(N, 128))

    def wset(tm, tk):
        return (2 * tm * tk * x_itemsize        # x double buffer
                + 2 * tn * tk * w_itemsize      # weight double buffer
                + 2 * tm * tn * x_itemsize      # output double buffer
                + tm * tn * 4                   # f32 accumulator
                + 2 * tn * 4)                   # bias

    for tm_cap in (512, 256, 128):
        if wset(tm_cap, K) <= work_budget:
            return tm_cap, tn, K

    # K must be tiled: keep tm modest, spend remaining VMEM on reduction depth.
    tm_cap = 128
    fixed = 2 * tm_cap * tn * x_itemsize + tm_cap * tn * 4 + 2 * tn * 4
    per_k = 2 * tm_cap * x_itemsize + 2 * tn * w_itemsize
    tk = max(512, ((work_budget - fixed) // per_k) // 512 * 512)
    if tk >= K:
        tk = K
    return tm_cap, tn, tk


# -----------------------------------------------------------------------------
# ReplicatedLinear
# -----------------------------------------------------------------------------
class PallasReplicatedLinear:
    """y = F.linear(x, W, b) with x (..., K), W (N, K), b (N,) or None.

    Tile selection and weight/bias zero-padding happen ONCE at construction
    (weights are static for ReplicatedLinear); __call__ only pads x.
    """

    def __init__(self, weight, bias=None, *, work_budget_bytes=None):
        N, K = weight.shape
        self.N, self.K = int(N), int(K)
        self.w_itemsize = jnp.dtype(weight.dtype).itemsize

        work, limit = _vmem_budget_bytes()
        if work_budget_bytes is not None:
            work = int(work_budget_bytes)
        self.vmem_limit = int(limit)

        tm_cap, tn, tk = _choose_tiles(
            self.N, self.K, self.w_itemsize, self.w_itemsize, work
        )
        self.tm_cap, self.tn, self.tk = tm_cap, tn, tk
        self.Np = _round_up(self.N, tn)
        self.Kp = _round_up(self.K, tk)
        self.grid_k = self.Kp // tk

        w = weight
        if self.Kp != self.K:
            w = jnp.pad(w, ((0, 0), (0, self.Kp - self.K)))
        if self.Np != self.N:
            w = jnp.pad(w, ((0, self.Np - self.N), (0, 0)))
        self.weight = w

        if bias is None:
            self.bias = None
        else:
            b = bias
            if self.Np != self.N:
                b = jnp.pad(b, (0, self.Np - self.N))
            self.bias = b.reshape(1, self.Np)

    def __call__(self, x):
        orig_shape = x.shape
        K = orig_shape[-1]
        assert K == self.K, (K, self.K)
        N, Np, Kp, tk = self.N, self.Np, self.Kp, self.tk

        x2d = x.reshape(-1, K)
        M = x2d.shape[0]
        itemsize = jnp.dtype(x.dtype).itemsize
        sub = 16 if itemsize <= 2 else 8

        tm = min(self.tm_cap, _round_up(M, sub))
        Mp = _round_up(M, tm)
        if Mp != M:
            x2d = jnp.pad(x2d, ((0, Mp - M), (0, 0)))
        if Kp != K:
            x2d = jnp.pad(x2d, ((0, 0), (0, Kp - K)))

        # v7x has 2 TensorCores: avoid a degenerate 1x1 parallel grid.
        tn = self.tn
        if Mp // tm == 1 and Np // tn == 1 and Np >= 256:
            tn //= 2                       # still a multiple of 128, divides Np
        grid_n = Np // tn
        grid_m = Mp // tm

        has_bias = self.bias is not None
        args = [x2d, self.weight] + ([self.bias] if has_bias else [])

        cost = pl.CostEstimate(
            flops=2 * M * N * K,
            transcendentals=0,
            bytes_accessed=(M * K * itemsize + N * K * self.w_itemsize
                            + (N * 4 if has_bias else 0) + M * N * itemsize),
        )

        if self.grid_k == 1:
            # Fast path: K untiled, weight panel resident across the M loop.
            grid = (grid_n, grid_m)
            in_specs = [
                pl.BlockSpec((tm, Kp), lambda j, i: (i, 0)),   # x tile
                pl.BlockSpec((tn, Kp), lambda j, i: (j, 0)),   # weight (N, K)
            ]
            if has_bias:
                in_specs.append(pl.BlockSpec((1, tn), lambda j, i: (0, j)))
            out_spec = pl.BlockSpec((tm, tn), lambda j, i: (i, j))
            kernel = _linear_k1_bias_kernel if has_bias else _linear_k1_nobias_kernel
            scratch = ()
            dims = ("parallel", "parallel")
        else:
            grid = (grid_n, grid_m, self.grid_k)
            in_specs = [
                pl.BlockSpec((tm, tk), lambda j, i, k: (i, k)),
                pl.BlockSpec((tn, tk), lambda j, i, k: (j, k)),
            ]
            if has_bias:
                in_specs.append(pl.BlockSpec((1, tn), lambda j, i, k: (0, j)))
            out_spec = pl.BlockSpec((tm, tn), lambda j, i, k: (i, j))
            kernel = (_linear_ktiled_bias_kernel if has_bias
                      else _linear_ktiled_nobias_kernel)
            scratch = (pltpu.VMEM((tm, tn), jnp.float32),)
            dims = ("parallel", "parallel", "arbitrary")

        out = pl.pallas_call(
            kernel,
            out_shape=jax.ShapeDtypeStruct((Mp, Np), x.dtype),
            grid_spec=pltpu.PrefetchScalarGridSpec(
                num_scalar_prefetch=0,
                grid=grid,
                in_specs=in_specs,
                out_specs=out_spec,
                scratch_shapes=list(scratch),
            ),
            compiler_params=pltpu.CompilerParams(
                dimension_semantics=dims,
                vmem_limit_bytes=self.vmem_limit,
            ),
            cost_estimate=cost,
        )(*args)

        if Mp != M or Np != N:
            out = out[:M, :N]
        return out.reshape(*orig_shape[:-1], N)


def replicated_linear(x, weight, bias=None):
    """One-shot functional form.  For repeated calls, build PallasReplicatedLinear
    once so weight/bias padding stays out of the hot path."""
    return PallasReplicatedLinear(weight, bias)(x)


# TODO(synk): weight_loader() is host-side parameter copying (param.data.copy_),
# not a device kernel; it has no Pallas equivalent and is intentionally omitted.


if __name__ == "__main__":
    key = jax.random.PRNGKey(0)
    k1, k2, k3, k4, k5 = jax.random.split(key, 5)

    # --- ReplicatedLinear-sized test (K untiled fast path) -------------------
    batch, seq, input_size, output_size = 2, 8, 32, 48
    x = jax.random.normal(k1, (batch, seq, input_size), dtype=jnp.float32)
    weight = jax.random.normal(k2, (output_size, input_size), jnp.float32) * 0.05
    bias = jax.random.normal(k3, (output_size,), jnp.float32) * 0.1

    layer = PallasReplicatedLinear(weight, bias)
    y = jax.block_until_ready(layer(x))
    y_ref = jnp.einsum("bsk,nk->bsn", x, weight) + bias
    assert y.shape == (batch, seq, output_size)
    assert jnp.allclose(y, y_ref, atol=1e-4, rtol=1e-4)

    # Default ReplicatedLinear config: bias=False
    layer_nb = PallasReplicatedLinear(weight, None)
    y_nb = jax.block_until_ready(layer_nb(x))
    y_nb_ref = jnp.einsum("bsk,nk->bsn", x, weight)
    assert jnp.allclose(y_nb, y_nb_ref, atol=1e-4, rtol=1e-4)

    # --- Force the K-tiled reduction path via a tiny VMEM budget -------------
    in2, out2 = 1024, 256
    x2 = jax.random.normal(k4, (batch, seq, in2), jnp.float32) * 0.1
    w2 = jax.random.normal(k5, (out2, in2), jnp.float32) * 0.02
    b2 = jnp.linspace(-1.0, 1.0, out2, dtype=jnp.float32)

    layer2 = PallasReplicatedLinear(w2, b2, work_budget_bytes=3 << 20)
    assert layer2.grid_k > 1, "expected K-tiled path to be exercised"
    y2 = jax.block_until_ready(layer2(x2))
    y2_ref = jnp.einsum("bsk,nk->bsn", x2, w2,
                        precision=lax.Precision.HIGHEST) + b2
    assert jnp.allclose(y2, y2_ref, atol=5e-3, rtol=5e-3)

    layer2_nb = PallasReplicatedLinear(w2, None, work_budget_bytes=3 << 20)
    y2_nb = jax.block_until_ready(layer2_nb(x2))
    y2_nb_ref = jnp.einsum("bsk,nk->bsn", x2, w2,
                           precision=lax.Precision.HIGHEST)
    assert jnp.allclose(y2_nb, y2_nb_ref, atol=5e-3, rtol=5e-3)

    # Functional one-shot form still works.
    y_fn = jax.block_until_ready(replicated_linear(x, weight, bias))
    assert jnp.allclose(y_fn, y_ref, atol=1e-4, rtol=1e-4)

    print("KERNEL_OK")
</pallas_src>

<mosaic_0001>
module attributes {stable_mosaic.version = 11 : i64} {
  func.func @_linear_k1_bias_kernel(%arg0: i32, %arg1: i32, %arg2: memref<16x32xf32, #tpu.memory_space<vmem>>, %arg3: memref<128x32xf32, #tpu.memory_space<vmem>>, %arg4: memref<1x128xf32, #tpu.memory_space<vmem>>, %arg5: memref<16x128xf32, #tpu.memory_space<vmem>>) attributes {dimension_semantics = [#tpu.dimension_semantics<parallel>, #tpu.dimension_semantics<parallel>], iteration_bounds = array<i64: 1, 1>, scalar_prefetch = 0 : i64, scratch_operands = 0 : i64, tpu.core_type = #tpu.core_type<tc>, window_params = [{transform_indices = @transform_0, window_bounds = array<i64: 16, 32>}, {transform_indices = @transform_1, window_bounds = array<i64: 128, 32>}, {transform_indices = @transform_2, window_bounds = array<i64: 1, 128>}, {transform_indices = @transform_3, window_bounds = array<i64: 16, 128>}]} {
    %c0 = arith.constant 0 : index
    %c0_0 = arith.constant 0 : index
    %0 = vector.load %arg2[%c0, %c0_0] : memref<16x32xf32, #tpu.memory_space<vmem>>, vector<16x32xf32>
    %c0_1 = arith.constant 0 : index
    %c0_2 = arith.constant 0 : index
    %1 = vector.load %arg3[%c0_1, %c0_2] : memref<128x32xf32, #tpu.memory_space<vmem>>, vector<128x32xf32>
    %cst = arith.constant dense<0.000000e+00> : vector<16x128xf32>
    %2 = tpu.matmul %0, %1, %cst {dimension_numbers = #tpu.dot_dimension_numbers<[1], [1], [0], [0], [0, 0, 1, 0], [], []>} : vector<16x32xf32>, vector<128x32xf32>, vector<16x128xf32> -> vector<16x128xf32>
    %c0_3 = arith.constant 0 : index
    %c0_4 = arith.constant 0 : index
    %3 = vector.load %arg4[%c0_3, %c0_4] : memref<1x128xf32, #tpu.memory_space<vmem>>, vector<1x128xf32>
    %4 = vector.broadcast %3 : vector<1x128xf32> to vector<16x128xf32>
    %5 = arith.addf %2, %4 : vector<16x128xf32>
    %c0_5 = arith.constant 0 : index
    %c0_6 = arith.constant 0 : index
    %6 = vector.load %arg5[%c0_5, %c0_6] : memref<16x128xf32, #tpu.memory_space<vmem>>, vector<16x128xf32>
    tpu.vector_store %arg5[%c0_5, %c0_6], %5 {strides = array<i32>} : memref<16x128xf32, #tpu.memory_space<vmem>>, vector<16x128xf32>,
    return
  }
  func.func @transform_0(%arg0: i32, %arg1: i32) -> (i32, i32) {
    %c0_i32 = arith.constant 0 : i32
    %c0_i32_0 = arith.constant 0 : i32
    return %arg1, %c0_i32 : i32, i32
  }
  func.func @transform_1(%arg0: i32, %arg1: i32) -> (i32, i32) {
    %c0_i32 = arith.constant 0 : i32
    %c0_i32_0 = arith.constant 0 : i32
    return %arg0, %c0_i32 : i32, i32
  }
  func.func @transform_2(%arg0: i32, %arg1: i32) -> (i32, i32) {
    %c0_i32 = arith.constant 0 : i32
    %c0_i32_0 = arith.constant 0 : i32
    return %c0_i32, %arg0 : i32, i32
  }
  func.func @transform_3(%arg0: i32, %arg1: i32) -> (i32, i32) {
    %c0_i32 = arith.constant 0 : i32
    return %arg1, %arg0 : i32, i32
  }
}

</mosaic_0001>

<llo_original>
// kernel: tpu_custom_call.1
$region0: #{tpu_custom_call.1}
  #allocation0 [shape = 'u32[]', space=smem, size = 0x4, offset = 0x4, fixed_abs, tag = 'smem constant byte address 0x4 - core index']
  #allocation1 [shape = 'u32[144,128]{1,0:T(1,128)}', space=vmem, size = 0x12000, scoped, tag = 'internal scratch']
  %s0 = inlined_call_operand.vmem [shape: f32[16,32], index: 0, kind: input, shape index: {}]
  %s1 = inlined_call_operand.vmem [shape: f32[128,32], index: 1, kind: input, shape index: {}]
  %s2 = inlined_call_operand.vmem [shape: f32[1,128], index: 2, kind: input, shape index: {}]
  %s3 = inlined_call_operand.hbm [shape: f32[16,128], index: 3, kind: output, shape index: {}]
  %s4 = sld [smem:[#allocation0]]
  $region22: #{tpu_custom_call.1} parent=0
    _
  %s6 = ssub.s32 1, %s4
  %s7 = scalar_select 0, %s6, %s4
  $region1: #{tpu_custom_call.1} parent=0
    #allocation2 [shape = 'u8[8192]{0}', space=vmem, size = 0x2000, scoped, tag = 'output window, operand 0, single buffered']
    #allocation3 [shape = 's32[1]{0}', space=sflag, size = 0x4, scoped, tag = 'scoped memory for tpu_custom_call.1']
    %8 = vsyncpa [#allocation3], 0
    // Predicated region
    $region2: #{tpu_custom_call.1} parent=1 // pred_check
      _
    $region3: #{tpu_custom_call.1} parent=1 // pred_check_branch
      %10 = sbr.rel (0) target = $region5
    $region4: #{tpu_custom_call.1} parent=1 // pred_region
      _
    $region5: #{tpu_custom_call.1} parent=1 // pred_fallthru
      _
    // Predicated region
    $region6: #{tpu_custom_call.1} parent=1 // pred_check
      _
    $region7: #{tpu_custom_call.1} parent=1 // pred_check_branch
      %12 = sbr.rel (0) target = $region9
    $region8: #{tpu_custom_call.1} parent=1 // pred_region
      _
    $region9: #{tpu_custom_call.1} parent=1 // pred_fallthru
      _
    // Predicated region
    $region10: #{tpu_custom_call.1} parent=1 // pred_check
      _
    $region11: #{tpu_custom_call.1} parent=1 // pred_check_branch
      %14 = sbr.rel (0) target = $region13
    $region12: #{tpu_custom_call.1} parent=1 // pred_region
      _
    $region13: #{tpu_custom_call.1} parent=1 // pred_fallthru
      _
    %v15 = vld [vmem:[%s0] sm:$0xff]
    %v16 = vld [vmem:[%s0 + $0x8] sm:$0xff]
    %v17 = vld [vmem:[%s1] sm:$0xff]
    %v18 = vld [vmem:[%s1 + $0x8] sm:$0xff]
    %v19 = vld [vmem:[%s1 + $0x10] sm:$0xff]
    %v20 = vld [vmem:[%s1 + $0x18] sm:$0xff]
    %v21 = vld [vmem:[%s1 + $0x20] sm:$0xff]
    %v22 = vld [vmem:[%s1 + $0x28] sm:$0xff]
    %v23 = vld [vmem:[%s1 + $0x30] sm:$0xff]
    %v24 = vld [vmem:[%s1 + $0x38] sm:$0xff]
    %v25 = vld [vmem:[%s1 + $0x40] sm:$0xff]
    %v26 = vld [vmem:[%s1 + $0x48] sm:$0xff]
    %v27 = vld [vmem:[%s1 + $0x50] sm:$0xff]
    %v28 = vld [vmem:[%s1 + $0x58] sm:$0xff]
    %v29 = vld [vmem:[%s1 + $0x60] sm:$0xff]
    %v30 = vld [vmem:[%s1 + $0x68] sm:$0xff]
    %v31 = vld [vmem:[%s1 + $0x70] sm:$0xff]
    %v32 = vld [vmem:[%s1 + $0x78] sm:$0xff]
    %v33 = vld [vmem:[%s2] sm:$0x1]
    %v35 = vlaneseq
    %v36 = vshrl.u32 %v35, 7
    %v37 = vsub.s32 0, %v36
    %v38 = vrot.slane %v33, %v37
    %vm40 = vcmask 261120
    %v42 = vsel %vm40, %v15, 0
    %v45 = vsel %vm40, %v16, 0
    %v48 = vsel %vm40, %v17, 0
    %v51 = vsel %vm40, %v18, 0
    %v54 = vsel %vm40, %v19, 0
    %v57 = vsel %vm40, %v20, 0
    %v60 = vsel %vm40, %v21, 0
    %v63 = vsel %vm40, %v22, 0
    %v66 = vsel %vm40, %v23, 0
    %v69 = vsel %vm40, %v24, 0
    %v72 = vsel %vm40, %v25, 0
    %v75 = vsel %vm40, %v26, 0
    %v78 = vsel %vm40, %v27, 0
    %v81 = vsel %vm40, %v28, 0
    %v84 = vsel %vm40, %v29, 0
    %v87 = vsel %vm40, %v30, 0
    %v90 = vsel %vm40, %v31, 0
    %v93 = vsel %vm40, %v32, 0
    %95 = vmatprep.subr.mxu0 0.0
    %96 = vmatpush1.xpose.msra.mxu0 %v93
    %97 = vmatprep.subr.mxu0 0.0
    %98 = vmatpush1.xpose.msra.mxu0 %v90
    %99 = vmatprep.subr.mxu0 0.0
    %100 = vmatpush1.xpose.msra.mxu0 %v87
    %101 = vmatprep.subr.mxu0 0.0
    %102 = vmatpush1.xpose.msra.mxu0 %v84
    %103 = vmatprep.subr.mxu0 0.0
    %104 = vmatpush1.xpose.msra.mxu0 %v81
    %105 = vmatprep.subr.mxu0 0.0
    %106 = vmatpush1.xpose.msra.mxu0 %v78
    %107 = vmatprep.subr.mxu0 0.0
    %108 = vmatpush1.xpose.msra.mxu0 %v75
    %109 = vmatprep.subr.mxu0 0.0
    %110 = vmatpush1.xpose.msra.mxu0 %v72
    %111 = vmatprep.subr.mxu0 0.0
    %112 = vmatpush1.xpose.msra.mxu0 %v69
    %113 = vmatprep.subr.mxu0 0.0
    %114 = vmatpush1.xpose.msra.mxu0 %v66
    %115 = vmatprep.subr.mxu0 0.0
    %116 = vmatpush1.xpose.msra.mxu0 %v63
    %117 = vmatprep.subr.mxu0 0.0
    %118 = vmatpush1.xpose.msra.mxu0 %v60
    %119 = vmatprep.subr.mxu0 0.0
    %120 = vmatpush1.xpose.msra.mxu0 %v57
    %121 = vmatprep.subr.mxu0 0.0
    %122 = vmatpush1.xpose.msra.mxu0 %v54
    %123 = vmatprep.subr.mxu0 0.0
    %124 = vmatpush1.xpose.msra.mxu0 %v51
    %125 = vmatprep.subr.mxu0 0.0
    %126 = vmatpush1.xpose.msra.mxu0 %v48
    %127 = vmatprep.subr.mxu0 0.0
    %128 = vmatpush2.xpose.msra.mxu0 0.0
    %129 = vmatprep.subr.mxu0 0.0
    %130 = vmatpush2.xpose.msra.mxu0 0.0
    %131 = vmatprep.subr.mxu0 0.0
    %132 = vmatpush2.xpose.msra.mxu0 0.0
    %133 = vmatprep.subr.mxu0 0.0
    %134 = vmatpush2.xpose.msra.mxu0 0.0
    %135 = vmatprep.subr.mxu0 0.0
    %136 = vmatpush2.xpose.msra.mxu0 0.0
    %137 = vmatprep.subr.mxu0 0.0
    %138 = vmatpush2.xpose.msra.mxu0 0.0
    %139 = vmatprep.subr.mxu0 0.0
    %140 = vmatpush2.xpose.msra.mxu0 0.0
    %141 = vmatprep.subr.mxu0 0.0
    %142 = vmatpush2.xpose.msra.mxu0 0.0
    %143 = vmatprep.subr.mxu0 0.0
    %144 = vmatpush2.xpose.msra.mxu0 0.0
    %145 = vmatprep.subr.mxu0 0.0
    %146 = vmatpush2.xpose.msra.mxu0 0.0
    %147 = vmatprep.subr.mxu0 0.0
    %148 = vmatpush2.xpose.msra.mxu0 0.0
    %149 = vmatprep.subr.mxu0 0.0
    %150 = vmatpush2.xpose.msra.mxu0 0.0
    %151 = vmatprep.subr.mxu0 0.0
    %152 = vmatpush2.xpose.msra.mxu0 0.0
    %153 = vmatprep.subr.mxu0 0.0
    %154 = vmatpush2.xpose.msra.mxu0 0.0
    %155 = vmatprep.subr.mxu0 0.0
    %156 = vmatpush2.xpose.msra.mxu0 0.0
    %157 = vmatprep.subr.mxu0 0.0
    %158 = vmatpush2.xpose.msra.mxu0 0.0
    %159 = vmatprep.mubr.f32.mxu0 0.0
    %160 = vmatmul.mubr.f32.gmra.mxu0 %v42
    %v161 = vpop.f32.mrf.mxu0
    %v162 = vadd.f32 %v38, %v161
    %v163 = vpop.f32.mrf.mxu0
    %164 = vmatprep.mubr.f32.mxu0 0.0
    %165 = vmatmul.mubr.f32.gmra.mxu0 %v45
    %v166 = vpop.f32.mrf.mxu0
    %v167 = vadd.f32 %v38, %v166
    %v168 = vpop.f32.mrf.mxu0
    %169 = vdwg.mxu0
    %170 = vst [vmem:[#allocation2] sm:$0xff] %v162
    %171 = vst [vmem:[#allocation2 + $0x8] sm:$0xff] %v167
    // Predicated region
    $region14: #{tpu_custom_call.1} parent=1 // pred_check
      _
    $region15: #{tpu_custom_call.1} parent=1 // pred_check_branch
      %173 = sbr.rel (0) target = $region17
    $region16: #{tpu_custom_call.1} parent=1 // pred_region
      %s175 = ssub.s32 256, 256
      %176 = vsyncadd [#allocation3], %s175
      %s177 = sshll.u32 [#allocation2], 4
      %s178 = int_to_ptr.vmem [resolvable:$true] %s177
      %183 = dma.vmem_to_hbm [thread:$0]  %s178, 256, %s3, [#allocation3], 128, 128, 8
    $region17: #{tpu_custom_call.1} parent=1 // pred_fallthru
      _
    // Predicated region
    $region18: #{tpu_custom_call.1} parent=1 // pred_check
      _
    $region19: #{tpu_custom_call.1} parent=1 // pred_check_branch
      %185 = sbr.rel (0) target = $region21
    $region20: #{tpu_custom_call.1} parent=1 // pred_region
      %186 = dma.done [#allocation3], 256
    $region21: #{tpu_custom_call.1} parent=1 // pred_fallthru
      _
    %187 = vsyncpa [#allocation3], 1

</llo_original>
